<compile_context>
chip_gen: v5e
topology: v5e:2x2
jax: 0.10.0
libtpu: 0.0.40
codegen_flags: <defaults>
</compile_context>

<pallas_src>
import jax
import jax.numpy as jnp
from jax import lax
from jax.experimental import pallas as pl
from jax.experimental.pallas import tpu as pltpu

LEAKY_SLOPE = 0.1  # matches nn.LeakyReLU(0.1)


def _leaky_relu(x, slope=LEAKY_SLOPE):
    return jnp.where(x > 0, x, slope * x)


def mlp_kernel(x_ref,
               w1_ref, b1_ref,
               w2_ref, b2_ref,
               w3_ref, b3_ref,
               w4_ref, b4_ref,
               o_ref):
    x = x_ref[...]                                   # (TILE_B, F), f32 or bf16

    # layer1 + LeakyReLU   (dropout p=0.1 == identity in eval mode)
    h = jnp.dot(x, w1_ref[...], preferred_element_type=jnp.float32) + b1_ref[...]
    h = _leaky_relu(h)

    # layer2 + LeakyReLU   (dropout p=0.1 == identity in eval mode)
    h = jnp.dot(h.astype(w2_ref.dtype), w2_ref[...],
                preferred_element_type=jnp.float32) + b2_ref[...]
    h = _leaky_relu(h)

    # layer3 + LeakyReLU
    h = jnp.dot(h.astype(w3_ref.dtype), w3_ref[...],
                preferred_element_type=jnp.float32) + b3_ref[...]
    h = _leaky_relu(h)                               # (TILE_B, 32), f32

    # output layer, lane-dense with the transpose folded into the contraction:
    # w4 (1, 32) . h (TILE_B, 32) over their last dims -> (1, TILE_B)
    out_row = lax.dot_general(w4_ref[...], h,
                              dimension_numbers=(((1,), (1,)), ((), ())),
                              preferred_element_type=jnp.float32)
    o_ref[0] = (out_row + b4_ref[...]).astype(o_ref.dtype)


def _round_up(n, m):
    return ((n + m - 1) // m) * m


def _choose_tile_b(batch, max_tile_b):
    """Batch tile: multiple of 128 (sublane/MXU aligned, lane-dense output),
    large enough to amortize the ~0.35us/grid-step overhead, but capped so the
    grid keeps >= 2 steps when B allows it (v7x's two TCs split the parallel axis)."""
    if batch <= 128:
        return 128
    return min(max_tile_b, _round_up(pl.cdiv(batch, 2), 128))


def _resident_spec(arr):
    """Constant block index -> block stays VMEM-resident across grid steps.
    Single-buffered where supported: a never-changing block needs no second
    pipeline buffer."""
    idx = lambda i: (0, 0)
    try:
        return pl.BlockSpec(arr.shape, idx, pipeline_mode=pl.Buffered(1))
    except (TypeError, AttributeError):   # older jax: fall back to default buffering
        return pl.BlockSpec(arr.shape, idx)


def nn_model_forward(x, params, *, max_tile_b=1024, compute_dtype=jnp.bfloat16):
    """x: (B, F) float32.

    params: w1,w2,w3 stored transposed as (in, out); w4 in PyTorch layout
    (out, in) = (1, 32); b1..b3 as (1, out); b4 as (1, 1).
    compute_dtype=bf16 (default) halves HBM traffic for x (the only B-scaling
    stream) and cuts MXU passes; accumulation, bias adds and LeakyReLU stay f32.
    Use compute_dtype=jnp.float32 for exact f32 semantics.
    """
    B, F = x.shape
    tile_b = _choose_tile_b(B, max_tile_b)
    num_tiles = pl.cdiv(B, tile_b)
    rows = num_tiles * tile_b

    # No jnp.pad of x: the (possibly partial) last tile is handled by Pallas
    # boundary masking; its garbage rows produce garbage outputs that the
    # final [:B] slice discards (no reduction ever touches the raw out slab).
    x_k = x.astype(compute_dtype)
    w1 = params["w1"].astype(compute_dtype)
    w2 = params["w2"].astype(compute_dtype)
    w3 = params["w3"].astype(compute_dtype)
    b1, b2, b3 = params["b1"], params["b2"], params["b3"]   # bias adds stay f32
    w4, b4 = params["w4"], params["b4"]                     # tiny final layer stays f32

    d1, d2, d3 = w1.shape[1], w2.shape[1], w3.shape[1]
    flops = 2 * rows * (F * d1 + d1 * d2 + d2 * d3 + d3 * 1)
    bytes_accessed = int(
        x_k.size * x_k.dtype.itemsize + rows * 4
        + sum(a.size * a.dtype.itemsize for a in (w1, b1, w2, b2, w3, b3, w4, b4)))

    out = pl.pallas_call(
        mlp_kernel,
        out_shape=jax.ShapeDtypeStruct((num_tiles, 1, tile_b), jnp.float32),
        grid=(num_tiles,),
        in_specs=[
            pl.BlockSpec((tile_b, F), lambda i: (i, 0)),    # x: one batch tile / step
            _resident_spec(w1), _resident_spec(b1),
            _resident_spec(w2), _resident_spec(b2),
            _resident_spec(w3), _resident_spec(b3),
            _resident_spec(w4), _resident_spec(b4),
        ],
        # Lane-dense output slab: full unmasked 128-lane stores each step.
        out_specs=pl.BlockSpec((1, 1, tile_b), lambda i: (i, 0, 0)),
        compiler_params=pltpu.CompilerParams(
            dimension_semantics=("parallel",),   # v7x: 2 TCs split the batch grid
            vmem_limit_bytes=32 * 1024 * 1024,   # well inside v7x's 64 MiB VMEM
        ),
        cost_estimate=pl.CostEstimate(
            flops=flops, transcendentals=0, bytes_accessed=bytes_accessed),
    )(x_k, w1, b1, w2, b2, w3, b3, w4, b4)

    # (num_tiles, 1, TILE_B) lane-dense slab -> (B, 1)
    return out.reshape(rows, 1)[:B]


def init_params(key, in_features):
    """PyTorch nn.Linear-style init: U[-1/sqrt(fan_in), +1/sqrt(fan_in)].
    w1..w3 stored as (in, out); w4 stored as (out, in) = (1, 32); biases (1, out)."""
    dims = [(in_features, 128), (128, 64), (64, 32), (32, 1)]
    params = {}
    keys = jax.random.split(key, 2 * len(dims))
    for i, (fan_in, fan_out) in enumerate(dims):
        bound = 1.0 / (fan_in ** 0.5)
        if i < 3:
            w = jax.random.uniform(keys[2 * i], (fan_in, fan_out),
                                   minval=-bound, maxval=bound, dtype=jnp.float32)
        else:  # final layer kept in PyTorch (out, in) layout for the folded transpose
            w = jax.random.uniform(keys[2 * i], (fan_out, fan_in),
                                   minval=-bound, maxval=bound, dtype=jnp.float32)
        b = jax.random.uniform(keys[2 * i + 1], (1, fan_out),
                               minval=-bound, maxval=bound, dtype=jnp.float32)
        params[f"w{i + 1}"] = w
        params[f"b{i + 1}"] = b
    return params


def ref_forward(x, p):
    h = _leaky_relu(x @ p["w1"] + p["b1"])
    h = _leaky_relu(h @ p["w2"] + p["b2"])
    h = _leaky_relu(h @ p["w3"] + p["b3"])
    return h @ p["w4"].T + p["b4"]


if __name__ == "__main__":
    key = jax.random.PRNGKey(0)
    k_x, k_p, k_x2 = jax.random.split(key, 3)

    F = 32   # stand-in for X_train_scaled.shape[1]
    B = 8    # small batch
    x = jax.random.normal(k_x, (B, F), dtype=jnp.float32)
    params = init_params(k_p, F)
    expected = ref_forward(x, params)

    # f32 path (tolerance covers XLA's default bf16-pass matmul precision on TPU
    # in the pure-JAX reference vs the kernel's f32-accumulated MXU matmuls).
    out_f32 = jax.block_until_ready(
        nn_model_forward(x, params, compute_dtype=jnp.float32))
    assert out_f32.shape == (B, 1)
    assert jnp.allclose(out_f32, expected, atol=2e-2, rtol=2e-2)

    # default bf16-operand / f32-accumulate path — looser tolerance
    out_bf16 = jax.block_until_ready(nn_model_forward(x, params))
    assert out_bf16.shape == (B, 1)
    assert jnp.allclose(out_bf16, expected, atol=1e-1, rtol=1e-1)

    # multi-tile + non-divisible batch: exercises boundary masking (no jnp.pad)
    # and a 2-step parallel grid.
    B2 = 300
    x2 = jax.random.normal(k_x2, (B2, F), dtype=jnp.float32)
    expected2 = ref_forward(x2, params)
    out2 = jax.block_until_ready(
        nn_model_forward(x2, params, compute_dtype=jnp.float32))
    assert out2.shape == (B2, 1)
    assert jnp.allclose(out2, expected2, atol=2e-2, rtol=2e-2)

    print("KERNEL_OK")
</pallas_src>

<mosaic_0001>
module attributes {stable_mosaic.version = 11 : i64} {
  func.func @mlp_kernel(%arg0: i32, %arg1: memref<128x32xf32, #tpu.memory_space<vmem>>, %arg2: memref<32x128xf32, #tpu.memory_space<vmem>>, %arg3: memref<1x128xf32, #tpu.memory_space<vmem>>, %arg4: memref<128x64xf32, #tpu.memory_space<vmem>>, %arg5: memref<1x64xf32, #tpu.memory_space<vmem>>, %arg6: memref<64x32xf32, #tpu.memory_space<vmem>>, %arg7: memref<1x32xf32, #tpu.memory_space<vmem>>, %arg8: memref<1x32xf32, #tpu.memory_space<vmem>>, %arg9: memref<1x1xf32, #tpu.memory_space<vmem>>, %arg10: memref<1x1x128xf32, #tpu.memory_space<vmem>>) attributes {dimension_semantics = [#tpu.dimension_semantics<parallel>], iteration_bounds = array<i64: 1>, scalar_prefetch = 0 : i64, scratch_operands = 0 : i64, tpu.core_type = #tpu.core_type<tc>, window_params = [{transform_indices = @transform_0, window_bounds = array<i64: 128, 32>}, {pipeline_mode = #tpu.pipeline_mode<synchronous>, transform_indices = @transform_1, window_bounds = array<i64: 32, 128>}, {pipeline_mode = #tpu.pipeline_mode<synchronous>, transform_indices = @transform_2, window_bounds = array<i64: 1, 128>}, {pipeline_mode = #tpu.pipeline_mode<synchronous>, transform_indices = @transform_3, window_bounds = array<i64: 128, 64>}, {pipeline_mode = #tpu.pipeline_mode<synchronous>, transform_indices = @transform_4, window_bounds = array<i64: 1, 64>}, {pipeline_mode = #tpu.pipeline_mode<synchronous>, transform_indices = @transform_5, window_bounds = array<i64: 64, 32>}, {pipeline_mode = #tpu.pipeline_mode<synchronous>, transform_indices = @transform_6, window_bounds = array<i64: 1, 32>}, {pipeline_mode = #tpu.pipeline_mode<synchronous>, transform_indices = @transform_7, window_bounds = array<i64: 1, 32>}, {pipeline_mode = #tpu.pipeline_mode<synchronous>, transform_indices = @transform_8, window_bounds = array<i64: 1, 1>}, {transform_indices = @transform_9, window_bounds = array<i64: 1, 1, 128>}]} {
    %c0 = arith.constant 0 : index
    %c0_0 = arith.constant 0 : index
    %0 = vector.load %arg1[%c0, %c0_0] : memref<128x32xf32, #tpu.memory_space<vmem>>, vector<128x32xf32>
    %c0_1 = arith.constant 0 : index
    %c0_2 = arith.constant 0 : index
    %1 = vector.load %arg2[%c0_1, %c0_2] : memref<32x128xf32, #tpu.memory_space<vmem>>, vector<32x128xf32>
    %cst = arith.constant dense<0.000000e+00> : vector<128x128xf32>
    %2 = tpu.matmul %0, %1, %cst {dimension_numbers = #tpu.dot_dimension_numbers<[1], [0], [0], [1], [0, 0, 1, 1], [], []>} : vector<128x32xf32>, vector<32x128xf32>, vector<128x128xf32> -> vector<128x128xf32>
    %c0_3 = arith.constant 0 : index
    %c0_4 = arith.constant 0 : index
    %3 = vector.load %arg3[%c0_3, %c0_4] : memref<1x128xf32, #tpu.memory_space<vmem>>, vector<1x128xf32>
    %4 = vector.broadcast %3 : vector<1x128xf32> to vector<128x128xf32>
    %5 = arith.addf %2, %4 : vector<128x128xf32>
    %cst_5 = arith.constant 0.000000e+00 : f32
    %6 = vector.broadcast %cst_5 : f32 to vector<128x128xf32>
    %7 = arith.cmpf ogt, %5, %6 : vector<128x128xf32>
    %cst_6 = arith.constant 1.000000e-01 : f32
    %8 = vector.broadcast %cst_6 : f32 to vector<128x128xf32>
    %9 = arith.mulf %8, %5 : vector<128x128xf32>
    %10 = arith.select %7, %5, %9 : vector<128x128xi1>, vector<128x128xf32>
    %c0_7 = arith.constant 0 : index
    %c0_8 = arith.constant 0 : index
    %11 = vector.load %arg4[%c0_7, %c0_8] : memref<128x64xf32, #tpu.memory_space<vmem>>, vector<128x64xf32>
    %cst_9 = arith.constant dense<0.000000e+00> : vector<128x64xf32>
    %12 = tpu.matmul %10, %11, %cst_9 {dimension_numbers = #tpu.dot_dimension_numbers<[1], [0], [0], [1], [0, 0, 1, 1], [], []>} : vector<128x128xf32>, vector<128x64xf32>, vector<128x64xf32> -> vector<128x64xf32>
    %c0_10 = arith.constant 0 : index
    %c0_11 = arith.constant 0 : index
    %13 = vector.load %arg5[%c0_10, %c0_11] : memref<1x64xf32, #tpu.memory_space<vmem>>, vector<1x64xf32>
    %14 = vector.broadcast %13 : vector<1x64xf32> to vector<128x64xf32>
    %15 = arith.addf %12, %14 : vector<128x64xf32>
    %cst_12 = arith.constant 0.000000e+00 : f32
    %16 = vector.broadcast %cst_12 : f32 to vector<128x64xf32>
    %17 = arith.cmpf ogt, %15, %16 : vector<128x64xf32>
    %cst_13 = arith.constant 1.000000e-01 : f32
    %18 = vector.broadcast %cst_13 : f32 to vector<128x64xf32>
    %19 = arith.mulf %18, %15 : vector<128x64xf32>
    %20 = arith.select %17, %15, %19 : vector<128x64xi1>, vector<128x64xf32>
    %c0_14 = arith.constant 0 : index
    %c0_15 = arith.constant 0 : index
    %21 = vector.load %arg6[%c0_14, %c0_15] : memref<64x32xf32, #tpu.memory_space<vmem>>, vector<64x32xf32>
    %cst_16 = arith.constant dense<0.000000e+00> : vector<128x32xf32>
    %22 = tpu.matmul %20, %21, %cst_16 {dimension_numbers = #tpu.dot_dimension_numbers<[1], [0], [0], [1], [0, 0, 1, 1], [], []>} : vector<128x64xf32>, vector<64x32xf32>, vector<128x32xf32> -> vector<128x32xf32>
    %c0_17 = arith.constant 0 : index
    %c0_18 = arith.constant 0 : index
    %23 = vector.load %arg7[%c0_17, %c0_18] : memref<1x32xf32, #tpu.memory_space<vmem>>, vector<1x32xf32>
    %24 = vector.broadcast %23 : vector<1x32xf32> to vector<128x32xf32>
    %25 = arith.addf %22, %24 : vector<128x32xf32>
    %cst_19 = arith.constant 0.000000e+00 : f32
    %26 = vector.broadcast %cst_19 : f32 to vector<128x32xf32>
    %27 = arith.cmpf ogt, %25, %26 : vector<128x32xf32>
    %cst_20 = arith.constant 1.000000e-01 : f32
    %28 = vector.broadcast %cst_20 : f32 to vector<128x32xf32>
    %29 = arith.mulf %28, %25 : vector<128x32xf32>
    %30 = arith.select %27, %25, %29 : vector<128x32xi1>, vector<128x32xf32>
    %c0_21 = arith.constant 0 : index
    %c0_22 = arith.constant 0 : index
    %31 = vector.load %arg8[%c0_21, %c0_22] : memref<1x32xf32, #tpu.memory_space<vmem>>, vector<1x32xf32>
    %cst_23 = arith.constant dense<0.000000e+00> : vector<1x128xf32>
    %32 = tpu.matmul %31, %30, %cst_23 {dimension_numbers = #tpu.dot_dimension_numbers<[1], [1], [0], [0], [0, 0, 1, 0], [], []>} : vector<1x32xf32>, vector<128x32xf32>, vector<1x128xf32> -> vector<1x128xf32>
    %c0_24 = arith.constant 0 : index
    %c0_25 = arith.constant 0 : index
    %33 = vector.load %arg9[%c0_24, %c0_25] : memref<1x1xf32, #tpu.memory_space<vmem>>, vector<1x1xf32>
    %34 = vector.broadcast %33 : vector<1x1xf32> to vector<1x128xf32>
    %35 = arith.addf %32, %34 : vector<1x128xf32>
    %c0_26 = arith.constant 0 : index
    %c0_27 = arith.constant 0 : index
    %c0_28 = arith.constant 0 : index
    %36 = vector.load %arg10[%c0_26, %c0_27, %c0_28] : memref<1x1x128xf32, #tpu.memory_space<vmem>>, vector<1x1x128xf32>
    %37 = vector.shape_cast %36 : vector<1x1x128xf32> to vector<1x128xf32>
    %38 = vector.shape_cast %35 : vector<1x128xf32> to vector<1x1x128xf32>
    tpu.vector_store %arg10[%c0_26, %c0_27, %c0_28], %38 {strides = array<i32>} : memref<1x1x128xf32, #tpu.memory_space<vmem>>, vector<1x1x128xf32>,
    return
  }
  func.func @transform_0(%arg0: i32) -> (i32, i32) {
    %c0_i32 = arith.constant 0 : i32
    %c0_i32_0 = arith.constant 0 : i32
    return %arg0, %c0_i32 : i32, i32
  }
  func.func @transform_1(%arg0: i32) -> (i32, i32) {
    %c0_i32 = arith.constant 0 : i32
    %c0_i32_0 = arith.constant 0 : i32
    %c0_i32_1 = arith.constant 0 : i32
    return %c0_i32, %c0_i32_0 : i32, i32
  }
  func.func @transform_2(%arg0: i32) -> (i32, i32) {
    %c0_i32 = arith.constant 0 : i32
    %c0_i32_0 = arith.constant 0 : i32
    %c0_i32_1 = arith.constant 0 : i32
    return %c0_i32, %c0_i32_0 : i32, i32
  }
  func.func @transform_3(%arg0: i32) -> (i32, i32) {
    %c0_i32 = arith.constant 0 : i32
    %c0_i32_0 = arith.constant 0 : i32
    %c0_i32_1 = arith.constant 0 : i32
    return %c0_i32, %c0_i32_0 : i32, i32
  }
  func.func @transform_4(%arg0: i32) -> (i32, i32) {
    %c0_i32 = arith.constant 0 : i32
    %c0_i32_0 = arith.constant 0 : i32
    %c0_i32_1 = arith.constant 0 : i32
    return %c0_i32, %c0_i32_0 : i32, i32
  }
  func.func @transform_5(%arg0: i32) -> (i32, i32) {
    %c0_i32 = arith.constant 0 : i32
    %c0_i32_0 = arith.constant 0 : i32
    %c0_i32_1 = arith.constant 0 : i32
    return %c0_i32, %c0_i32_0 : i32, i32
  }
  func.func @transform_6(%arg0: i32) -> (i32, i32) {
    %c0_i32 = arith.constant 0 : i32
    %c0_i32_0 = arith.constant 0 : i32
    %c0_i32_1 = arith.constant 0 : i32
    return %c0_i32, %c0_i32_0 : i32, i32
  }
  func.func @transform_7(%arg0: i32) -> (i32, i32) {
    %c0_i32 = arith.constant 0 : i32
    %c0_i32_0 = arith.constant 0 : i32
    %c0_i32_1 = arith.constant 0 : i32
    return %c0_i32, %c0_i32_0 : i32, i32
  }
  func.func @transform_8(%arg0: i32) -> (i32, i32) {
    %c0_i32 = arith.constant 0 : i32
    %c0_i32_0 = arith.constant 0 : i32
    %c0_i32_1 = arith.constant 0 : i32
    return %c0_i32, %c0_i32_0 : i32, i32
  }
  func.func @transform_9(%arg0: i32) -> (i32, i32, i32) {
    %c0_i32 = arith.constant 0 : i32
    %c0_i32_0 = arith.constant 0 : i32
    %c0_i32_1 = arith.constant 0 : i32
    return %arg0, %c0_i32, %c0_i32_0 : i32, i32, i32
  }
}

</mosaic_0001>

<llo_original>
// kernel: tpu_custom_call.1
$region0: #{tpu_custom_call.1}
  #allocation0 [shape = 'u32[]', space=smem, size = 0x4, offset = 0x4, fixed_abs, tag = 'smem constant byte address 0x4 - core index']
  #allocation1 [shape = 'u32[72,128]{1,0:T(1,128)}', space=vmem, size = 0x9000, scoped, tag = 'internal scratch']
  #allocation2 [shape = 'f32[1,1]{1,0:T(1,128)S(1)}', space=vmem, size = 0x200, scoped, tag = 'scoped memory for tpu_custom_call.1']
  %s0 = inlined_call_operand.vmem [shape: f32[8,32], index: 0, kind: input, shape index: {}]
  %s1 = inlined_call_operand.vmem [shape: f32[32,128], index: 1, kind: input, shape index: {}]
  %s2 = inlined_call_operand.vmem [shape: f32[1,128], index: 2, kind: input, shape index: {}]
  %s3 = inlined_call_operand.vmem [shape: f32[128,64], index: 3, kind: input, shape index: {}]
  %s4 = inlined_call_operand.vmem [shape: f32[1,64], index: 4, kind: input, shape index: {}]
  %s5 = inlined_call_operand.vmem [shape: f32[64,32], index: 5, kind: input, shape index: {}]
  %s6 = inlined_call_operand.vmem [shape: f32[1,32], index: 6, kind: input, shape index: {}]
  %s7 = inlined_call_operand.vmem [shape: f32[1,32], index: 7, kind: input, shape index: {}]
  %s8 = inlined_call_operand.<no memory space> [shape: f32[1,1], index: 8, kind: input, shape index: {}]
  %s9 = inlined_call_operand.hbm [shape: f32[1,1,128], index: 9, kind: output, shape index: {}]
  %s10 = sld [smem:[#allocation0]]
  $region46: #{tpu_custom_call.1} parent=0
    _
  %s12 = ssub.s32 1, %s10
  %s13 = scalar_select 0, %s12, %s10
  %v14 = vstv %s8
  %15 = vst [vmem:[#allocation2] sm:$0x1] %v14
  $region1: #{tpu_custom_call.1} parent=0
    #allocation3 [shape = 'u8[512]{0}', space=vmem, size = 0x400, scoped, tag = 'output window, operand 0, single buffered']
    #allocation4 [shape = 's32[1]{0}', space=sflag, size = 0x4, scoped, tag = 'scoped memory for tpu_custom_call.1']
    %16 = vsyncpa [#allocation4], 0
    // Predicated region
    $region2: #{tpu_custom_call.1} parent=1 // pred_check
      _
    $region3: #{tpu_custom_call.1} parent=1 // pred_check_branch
      %18 = sbr.rel (0) target = $region5
    $region4: #{tpu_custom_call.1} parent=1 // pred_region
      _
    $region5: #{tpu_custom_call.1} parent=1 // pred_fallthru
      _
    // Predicated region
    $region6: #{tpu_custom_call.1} parent=1 // pred_check
      _
    $region7: #{tpu_custom_call.1} parent=1 // pred_check_branch
      %20 = sbr.rel (0) target = $region9
    $region8: #{tpu_custom_call.1} parent=1 // pred_region
      _
    $region9: #{tpu_custom_call.1} parent=1 // pred_fallthru
      _
    // Predicated region
    $region10: #{tpu_custom_call.1} parent=1 // pred_check
      _
    $region11: #{tpu_custom_call.1} parent=1 // pred_check_branch
      %22 = sbr.rel (0) target = $region13
    $region12: #{tpu_custom_call.1} parent=1 // pred_region
      _
    $region13: #{tpu_custom_call.1} parent=1 // pred_fallthru
      _
    // Predicated region
    $region14: #{tpu_custom_call.1} parent=1 // pred_check
      _
    $region15: #{tpu_custom_call.1} parent=1 // pred_check_branch
      %24 = sbr.rel (0) target = $region17
    $region16: #{tpu_custom_call.1} parent=1 // pred_region
      _
    $region17: #{tpu_custom_call.1} parent=1 // pred_fallthru
      _
    // Predicated region
    $region18: #{tpu_custom_call.1} parent=1 // pred_check
      _
    $region19: #{tpu_custom_call.1} parent=1 // pred_check_branch
      %26 = sbr.rel (0) target = $region21
    $region20: #{tpu_custom_call.1} parent=1 // pred_region
      _
    $region21: #{tpu_custom_call.1} parent=1 // pred_fallthru
      _
    // Predicated region
    $region22: #{tpu_custom_call.1} parent=1 // pred_check
      _
    $region23: #{tpu_custom_call.1} parent=1 // pred_check_branch
      %28 = sbr.rel (0) target = $region25
    $region24: #{tpu_custom_call.1} parent=1 // pred_region
      _
    $region25: #{tpu_custom_call.1} parent=1 // pred_fallthru
      _
    // Predicated region
    $region26: #{tpu_custom_call.1} parent=1 // pred_check
      _
    $region27: #{tpu_custom_call.1} parent=1 // pred_check_branch
      %30 = sbr.rel (0) target = $region29
    $region28: #{tpu_custom_call.1} parent=1 // pred_region
      _
    $region29: #{tpu_custom_call.1} parent=1 // pred_fallthru
      _
    // Predicated region
    $region30: #{tpu_custom_call.1} parent=1 // pred_check
      _
    $region31: #{tpu_custom_call.1} parent=1 // pred_check_branch
      %32 = sbr.rel (0) target = $region33
    $region32: #{tpu_custom_call.1} parent=1 // pred_region
      _
    $region33: #{tpu_custom_call.1} parent=1 // pred_fallthru
      _
    // Predicated region
    $region34: #{tpu_custom_call.1} parent=1 // pred_check
      _
    $region35: #{tpu_custom_call.1} parent=1 // pred_check_branch
      %34 = sbr.rel (0) target = $region37
    $region36: #{tpu_custom_call.1} parent=1 // pred_region
      _
    $region37: #{tpu_custom_call.1} parent=1 // pred_fallthru
      _
    %v35 = vld [vmem:[%s0] sm:$0xff]
    %v36 = vld [vmem:[%s0 + $0x8] sm:$0xff]
    %v37 = vld [vmem:[%s0 + $0x10] sm:$0xff]
    %v38 = vld [vmem:[%s0 + $0x18] sm:$0xff]
    %v39 = vld [vmem:[%s0 + $0x20] sm:$0xff]
    %v40 = vld [vmem:[%s0 + $0x28] sm:$0xff]
    %v41 = vld [vmem:[%s0 + $0x30] sm:$0xff]
    %v42 = vld [vmem:[%s0 + $0x38] sm:$0xff]
    %v43 = vld [vmem:[%s0 + $0x40] sm:$0xff]
    %v44 = vld [vmem:[%s0 + $0x48] sm:$0xff]
    %v45 = vld [vmem:[%s0 + $0x50] sm:$0xff]
    %v46 = vld [vmem:[%s0 + $0x58] sm:$0xff]
    %v47 = vld [vmem:[%s0 + $0x60] sm:$0xff]
    %v48 = vld [vmem:[%s0 + $0x68] sm:$0xff]
    %v49 = vld [vmem:[%s0 + $0x70] sm:$0xff]
    %v50 = vld [vmem:[%s0 + $0x78] sm:$0xff]
    %v51 = vld [vmem:[%s1] sm:$0xff]
    %v52 = vld [vmem:[%s1 + $0x8] sm:$0xff]
    %v53 = vld [vmem:[%s1 + $0x10] sm:$0xff]
    %v54 = vld [vmem:[%s1 + $0x18] sm:$0xff]
    %v55 = vld [vmem:[%s2] sm:$0x1]
    %v57 = vperm.slane %v55, 0
    %vm59 = vcmask 261120
    %v61 = vsel %vm59, %v35, 0
    %v64 = vsel %vm59, %v36, 0
    %v67 = vsel %vm59, %v37, 0
    %v70 = vsel %vm59, %v38, 0
    %v73 = vsel %vm59, %v39, 0
    %v76 = vsel %vm59, %v40, 0
    %v79 = vsel %vm59, %v41, 0
    %v82 = vsel %vm59, %v42, 0
    %v85 = vsel %vm59, %v43, 0
    %v88 = vsel %vm59, %v44, 0
    %v91 = vsel %vm59, %v45, 0
    %v94 = vsel %vm59, %v46, 0
    %v97 = vsel %vm59, %v47, 0
    %v100 = vsel %vm59, %v48, 0
    %v103 = vsel %vm59, %v49, 0
    %v106 = vsel %vm59, %v50, 0
    %108 = vmatpush.msra.mxu0 0.0
    %109 = vmatpush.msra.mxu0 0.0
    %110 = vmatpush.msra.mxu0 0.0
    %111 = vmatpush.msra.mxu0 0.0
    %112 = vmatpush.msra.mxu0 0.0
    %113 = vmatpush.msra.mxu0 0.0
    %114 = vmatpush.msra.mxu0 0.0
    %115 = vmatpush.msra.mxu0 0.0
    %116 = vmatpush.msra.mxu0 0.0
    %117 = vmatpush.msra.mxu0 0.0
    %118 = vmatpush.msra.mxu0 0.0
    %119 = vmatpush.msra.mxu0 0.0
    %120 = vmatpush.msra.mxu0 %v54
    %121 = vmatpush.msra.mxu0 %v53
    %122 = vmatpush.msra.mxu0 %v52
    %123 = vmatpush.msra.mxu0 %v51
    %124 = vmatmul.f32.gmra.mxu0 %v61
    %v125 = vpop.f32.mrf.mxu0
    %v126 = vadd.f32 %v57, %v125
    %127 = vmatmul.f32.gmra.mxu0 %v64
    %v128 = vpop.f32.mrf.mxu0
    %v129 = vadd.f32 %v57, %v128
    %130 = vmatmul.f32.gmra.mxu0 %v67
    %v131 = vpop.f32.mrf.mxu0
    %v132 = vadd.f32 %v57, %v131
    %133 = vmatmul.f32.gmra.mxu0 %v70
    %v134 = vpop.f32.mrf.mxu0
    %v135 = vadd.f32 %v57, %v134
    %136 = vmatmul.f32.gmra.mxu0 %v73
    %v137 = vpop.f32.mrf.mxu0
    %v138 = vadd.f32 %v57, %v137
    %139 = vmatmul.f32.gmra.mxu0 %v76
    %v140 = vpop.f32.mrf.mxu0
    %v141 = vadd.f32 %v57, %v140
    %142 = vmatmul.f32.gmra.mxu0 %v79
    %v143 = vpop.f32.mrf.mxu0
    %v144 = vadd.f32 %v57, %v143
    %145 = vmatmul.f32.gmra.mxu0 %v82
    %v146 = vpop.f32.mrf.mxu0
    %v147 = vadd.f32 %v57, %v146
    %148 = vmatmul.f32.gmra.mxu0 %v85
    %v149 = vpop.f32.mrf.mxu0
    %v150 = vadd.f32 %v57, %v149
    %151 = vmatmul.f32.gmra.mxu0 %v88
    %v152 = vpop.f32.mrf.mxu0
    %v153 = vadd.f32 %v57, %v152
    %154 = vmatmul.f32.gmra.mxu0 %v91
    %v155 = vpop.f32.mrf.mxu0
    %v156 = vadd.f32 %v57, %v155
    %157 = vmatmul.f32.gmra.mxu0 %v94
    %v158 = vpop.f32.mrf.mxu0
    %v159 = vadd.f32 %v57, %v158
    %160 = vmatmul.f32.gmra.mxu0 %v97
    %v161 = vpop.f32.mrf.mxu0
    %v162 = vadd.f32 %v57, %v161
    %163 = vmatmul.f32.gmra.mxu0 %v100
    %v164 = vpop.f32.mrf.mxu0
    %v165 = vadd.f32 %v57, %v164
    %166 = vmatmul.f32.gmra.mxu0 %v103
    %v167 = vpop.f32.mrf.mxu0
    %v168 = vadd.f32 %v57, %v167
    %169 = vmatmul.f32.gmra.mxu0 %v106
    %v170 = vpop.f32.mrf.mxu0
    %v171 = vadd.f32 %v57, %v170
    %172 = vdwg.mxu0
    %vm173 = vcmp.gt.f32.partialorder %v126, 0.0
    %vm174 = vcmp.gt.f32.partialorder %v129, 0.0
    %vm175 = vcmp.gt.f32.partialorder %v132, 0.0
    %vm176 = vcmp.gt.f32.partialorder %v135, 0.0
    %vm177 = vcmp.gt.f32.partialorder %v138, 0.0
    %vm178 = vcmp.gt.f32.partialorder %v141, 0.0
    %vm179 = vcmp.gt.f32.partialorder %v144, 0.0
    %vm180 = vcmp.gt.f32.partialorder %v147, 0.0
    %vm181 = vcmp.gt.f32.partialorder %v150, 0.0
    %vm182 = vcmp.gt.f32.partialorder %v153, 0.0
    %vm183 = vcmp.gt.f32.partialorder %v156, 0.0
    %vm184 = vcmp.gt.f32.partialorder %v159, 0.0
    %vm185 = vcmp.gt.f32.partialorder %v162, 0.0
    %vm186 = vcmp.gt.f32.partialorder %v165, 0.0
    %vm187 = vcmp.gt.f32.partialorder %v168, 0.0
    %vm188 = vcmp.gt.f32.partialorder %v171, 0.0
    %v189 = vmul.f32 %v126, 0.1
    %v190 = vmul.f32 %v129, 0.1
    %v191 = vmul.f32 %v132, 0.1
    %v192 = vmul.f32 %v135, 0.1
    %v193 = vmul.f32 %v138, 0.1
    %v194 = vmul.f32 %v141, 0.1
    %v195 = vmul.f32 %v144, 0.1
    %v196 = vmul.f32 %v147, 0.1
    %v197 = vmul.f32 %v150, 0.1
    %v198 = vmul.f32 %v153, 0.1
    %v199 = vmul.f32 %v156, 0.1
    %v200 = vmul.f32 %v159, 0.1
    %v201 = vmul.f32 %v162, 0.1
    %v202 = vmul.f32 %v165, 0.1
    %v203 = vmul.f32 %v168, 0.1
    %v204 = vmul.f32 %v171, 0.1
    %v205 = vsel %vm173, %v126, %v189
    %v206 = vsel %vm174, %v129, %v190
    %v207 = vsel %vm175, %v132, %v191
    %v208 = vsel %vm176, %v135, %v192
    %v209 = vsel %vm177, %v138, %v193
    %v210 = vsel %vm178, %v141, %v194
    %v211 = vsel %vm179, %v144, %v195
    %v212 = vsel %vm180, %v147, %v196
    %v213 = vsel %vm181, %v150, %v197
    %v214 = vsel %vm182, %v153, %v198
    %v215 = vsel %vm183, %v156, %v199
    %v216 = vsel %vm184, %v159, %v200
    %v217 = vsel %vm185, %v162, %v201
    %v218 = vsel %vm186, %v165, %v202
    %v219 = vsel %vm187, %v168, %v203
    %v220 = vsel %vm188, %v171, %v204
    %v221 = vld [vmem:[%s3] sm:$0xff]
    %v222 = vld [vmem:[%s3 + $0x8] sm:$0xff]
    %v223 = vld [vmem:[%s3 + $0x10] sm:$0xff]
    %v224 = vld [vmem:[%s3 + $0x18] sm:$0xff]
    %v225 = vld [vmem:[%s3 + $0x20] sm:$0xff]
    %v226 = vld [vmem:[%s3 + $0x28] sm:$0xff]
    %v227 = vld [vmem:[%s3 + $0x30] sm:$0xff]
    %v228 = vld [vmem:[%s3 + $0x38] sm:$0xff]
    %v229 = vld [vmem:[%s3 + $0x40] sm:$0xff]
    %v230 = vld [vmem:[%s3 + $0x48] sm:$0xff]
    %v231 = vld [vmem:[%s3 + $0x50] sm:$0xff]
    %v232 = vld [vmem:[%s3 + $0x58] sm:$0xff]
    %v233 = vld [vmem:[%s3 + $0x60] sm:$0xff]
    %v234 = vld [vmem:[%s3 + $0x68] sm:$0xff]
    %v235 = vld [vmem:[%s3 + $0x70] sm:$0xff]
    %v236 = vld [vmem:[%s3 + $0x78] sm:$0xff]
    %v237 = vld [vmem:[%s4] sm:$0x1]
    %v239 = vperm.slane %v237, 0
    %241 = vmatpush.msra.mxu0 %v236
    %242 = vmatpush.msra.mxu0 %v235
    %243 = vmatpush.msra.mxu0 %v234
    %244 = vmatpush.msra.mxu0 %v233
    %245 = vmatpush.msra.mxu0 %v232
    %246 = vmatpush.msra.mxu0 %v231
    %247 = vmatpush.msra.mxu0 %v230
    %248 = vmatpush.msra.mxu0 %v229
    %249 = vmatpush.msra.mxu0 %v228
    %250 = vmatpush.msra.mxu0 %v227
    %251 = vmatpush.msra.mxu0 %v226
    %252 = vmatpush.msra.mxu0 %v225
    %253 = vmatpush.msra.mxu0 %v224
    %254 = vmatpush.msra.mxu0 %v223
    %255 = vmatpush.msra.mxu0 %v222
    %256 = vmatpush.msra.mxu0 %v221
    %257 = vmatmul.f32.gmra.mxu0 %v205
    %v258 = vpop.f32.mrf.mxu0
    %v259 = vadd.f32 %v239, %v258
    %260 = vmatmul.f32.gmra.mxu0 %v206
    %v261 = vpop.f32.mrf.mxu0
    %v262 = vadd.f32 %v239, %v261
    %263 = vmatmul.f32.gmra.mxu0 %v207
    %v264 = vpop.f32.mrf.mxu0
    %v265 = vadd.f32 %v239, %v264
    %266 = vmatmul.f32.gmra.mxu0 %v208
    %v267 = vpop.f32.mrf.mxu0
    %v268 = vadd.f32 %v239, %v267
    %269 = vmatmul.f32.gmra.mxu0 %v209
    %v270 = vpop.f32.mrf.mxu0
    %v271 = vadd.f32 %v239, %v270
    %272 = vmatmul.f32.gmra.mxu0 %v210
    %v273 = vpop.f32.mrf.mxu0
    %v274 = vadd.f32 %v239, %v273
    %275 = vmatmul.f32.gmra.mxu0 %v211
    %v276 = vpop.f32.mrf.mxu0
    %v277 = vadd.f32 %v239, %v276
    %278 = vmatmul.f32.gmra.mxu0 %v212
    %v279 = vpop.f32.mrf.mxu0
    %v280 = vadd.f32 %v239, %v279
    %281 = vmatmul.f32.gmra.mxu0 %v213
    %v282 = vpop.f32.mrf.mxu0
    %v283 = vadd.f32 %v239, %v282
    %284 = vmatmul.f32.gmra.mxu0 %v214
    %v285 = vpop.f32.mrf.mxu0
    %v286 = vadd.f32 %v239, %v285
    %287 = vmatmul.f32.gmra.mxu0 %v215
    %v288 = vpop.f32.mrf.mxu0
    %v289 = vadd.f32 %v239, %v288
    %290 = vmatmul.f32.gmra.mxu0 %v216
    %v291 = vpop.f32.mrf.mxu0
    %v292 = vadd.f32 %v239, %v291
    %293 = vmatmul.f32.gmra.mxu0 %v217
    %v294 = vpop.f32.mrf.mxu0
    %v295 = vadd.f32 %v239, %v294
    %296 = vmatmul.f32.gmra.mxu0 %v218
    %v297 = vpop.f32.mrf.mxu0
    %v298 = vadd.f32 %v239, %v297
    %299 = vmatmul.f32.gmra.mxu0 %v219
    %v300 = vpop.f32.mrf.mxu0
    %v301 = vadd.f32 %v239, %v300
    %302 = vmatmul.f32.gmra.mxu0 %v220
    %v303 = vpop.f32.mrf.mxu0
    %v304 = vadd.f32 %v239, %v303
    %305 = vdwg.mxu0
    %vm306 = vcmp.gt.f32.partialorder %v259, 0.0
    %vm307 = vcmp.gt.f32.partialorder %v262, 0.0
    %vm308 = vcmp.gt.f32.partialorder %v265, 0.0
    %vm309 = vcmp.gt.f32.partialorder %v268, 0.0
    %vm310 = vcmp.gt.f32.partialorder %v271, 0.0
    %vm311 = vcmp.gt.f32.partialorder %v274, 0.0
    %vm312 = vcmp.gt.f32.partialorder %v277, 0.0
    %vm313 = vcmp.gt.f32.partialorder %v280, 0.0
    %vm314 = vcmp.gt.f32.partialorder %v283, 0.0
    %vm315 = vcmp.gt.f32.partialorder %v286, 0.0
    %vm316 = vcmp.gt.f32.partialorder %v289, 0.0
    %vm317 = vcmp.gt.f32.partialorder %v292, 0.0
    %vm318 = vcmp.gt.f32.partialorder %v295, 0.0
    %vm319 = vcmp.gt.f32.partialorder %v298, 0.0
    %vm320 = vcmp.gt.f32.partialorder %v301, 0.0
    %vm321 = vcmp.gt.f32.partialorder %v304, 0.0
    %v322 = vmul.f32 %v259, 0.1
    %v323 = vmul.f32 %v262, 0.1
    %v324 = vmul.f32 %v265, 0.1
    %v325 = vmul.f32 %v268, 0.1
    %v326 = vmul.f32 %v271, 0.1
    %v327 = vmul.f32 %v274, 0.1
    %v328 = vmul.f32 %v277, 0.1
    %v329 = vmul.f32 %v280, 0.1
    %v330 = vmul.f32 %v283, 0.1
    %v331 = vmul.f32 %v286, 0.1
    %v332 = vmul.f32 %v289, 0.1
    %v333 = vmul.f32 %v292, 0.1
    %v334 = vmul.f32 %v295, 0.1
    %v335 = vmul.f32 %v298, 0.1
    %v336 = vmul.f32 %v301, 0.1
    %v337 = vmul.f32 %v304, 0.1
    %v338 = vsel %vm306, %v259, %v322
    %v339 = vsel %vm307, %v262, %v323
    %v340 = vsel %vm308, %v265, %v324
    %v341 = vsel %vm309, %v268, %v325
    %v342 = vsel %vm310, %v271, %v326
    %v343 = vsel %vm311, %v274, %v327
    %v344 = vsel %vm312, %v277, %v328
    %v345 = vsel %vm313, %v280, %v329
    %v346 = vsel %vm314, %v283, %v330
    %v347 = vsel %vm315, %v286, %v331
    %v348 = vsel %vm316, %v289, %v332
    %v349 = vsel %vm317, %v292, %v333
    %v350 = vsel %vm318, %v295, %v334
    %v351 = vsel %vm319, %v298, %v335
    %v352 = vsel %vm320, %v301, %v336
    %v353 = vsel %vm321, %v304, %v337
    %v354 = vld [vmem:[%s5] sm:$0xff]
    %v355 = vld [vmem:[%s5 + $0x8] sm:$0xff]
    %v356 = vld [vmem:[%s5 + $0x10] sm:$0xff]
    %v357 = vld [vmem:[%s5 + $0x18] sm:$0xff]
    %v358 = vld [vmem:[%s5 + $0x20] sm:$0xff]
    %v359 = vld [vmem:[%s5 + $0x28] sm:$0xff]
    %v360 = vld [vmem:[%s5 + $0x30] sm:$0xff]
    %v361 = vld [vmem:[%s5 + $0x38] sm:$0xff]
    %v362 = vld [vmem:[%s6] sm:$0x1]
    %v364 = vperm.slane %v362, 0
    %vm366 = vcmask 523264
    %v368 = vsel %vm366, %v338, 0
    %v371 = vsel %vm366, %v339, 0
    %v374 = vsel %vm366, %v340, 0
    %v377 = vsel %vm366, %v341, 0
    %v380 = vsel %vm366, %v342, 0
    %v383 = vsel %vm366, %v343, 0
    %v386 = vsel %vm366, %v344, 0
    %v389 = vsel %vm366, %v345, 0
    %v392 = vsel %vm366, %v346, 0
    %v395 = vsel %vm366, %v347, 0
    %v398 = vsel %vm366, %v348, 0
    %v401 = vsel %vm366, %v349, 0
    %v404 = vsel %vm366, %v350, 0
    %v407 = vsel %vm366, %v351, 0
    %v410 = vsel %vm366, %v352, 0
    %v413 = vsel %vm366, %v353, 0
    %415 = vmatpush.msra.mxu0 0.0
    %416 = vmatpush.msra.mxu0 0.0
    %417 = vmatpush.msra.mxu0 0.0
    %418 = vmatpush.msra.mxu0 0.0
    %419 = vmatpush.msra.mxu0 0.0
    %420 = vmatpush.msra.mxu0 0.0
    %421 = vmatpush.msra.mxu0 0.0
    %422 = vmatpush.msra.mxu0 0.0
    %423 = vmatpush.msra.mxu0 %v361
    %424 = vmatpush.msra.mxu0 %v360
    %425 = vmatpush.msra.mxu0 %v359
    %426 = vmatpush.msra.mxu0 %v358
    %427 = vmatpush.msra.mxu0 %v357
    %428 = vmatpush.msra.mxu0 %v356
    %429 = vmatpush.msra.mxu0 %v355
    %430 = vmatpush.msra.mxu0 %v354
    %431 = vmatmul.f32.gmra.mxu0 %v368
    %v432 = vpop.f32.mrf.mxu0
    %v433 = vadd.f32 %v364, %v432
    %434 = vmatmul.f32.gmra.mxu0 %v371
    %v435 = vpop.f32.mrf.mxu0
    %v436 = vadd.f32 %v364, %v435
    %437 = vmatmul.f32.gmra.mxu0 %v374
    %v438 = vpop.f32.mrf.mxu0
    %v439 = vadd.f32 %v364, %v438
    %440 = vmatmul.f32.gmra.mxu0 %v377
    %v441 = vpop.f32.mrf.mxu0
    %v442 = vadd.f32 %v364, %v441
    %443 = vmatmul.f32.gmra.mxu0 %v380
    %v444 = vpop.f32.mrf.mxu0
    %v445 = vadd.f32 %v364, %v444
    %446 = vmatmul.f32.gmra.mxu0 %v383
    %v447 = vpop.f32.mrf.mxu0
    %v448 = vadd.f32 %v364, %v447
    %449 = vmatmul.f32.gmra.mxu0 %v386
    %v450 = vpop.f32.mrf.mxu0
    %v451 = vadd.f32 %v364, %v450
    %452 = vmatmul.f32.gmra.mxu0 %v389
    %v453 = vpop.f32.mrf.mxu0
    %v454 = vadd.f32 %v364, %v453
    %455 = vmatmul.f32.gmra.mxu0 %v392
    %v456 = vpop.f32.mrf.mxu0
    %v457 = vadd.f32 %v364, %v456
    %458 = vmatmul.f32.gmra.mxu0 %v395
    %v459 = vpop.f32.mrf.mxu0
    %v460 = vadd.f32 %v364, %v459
    %461 = vmatmul.f32.gmra.mxu0 %v398
    %v462 = vpop.f32.mrf.mxu0
    %v463 = vadd.f32 %v364, %v462
    %464 = vmatmul.f32.gmra.mxu0 %v401
    %v465 = vpop.f32.mrf.mxu0
    %v466 = vadd.f32 %v364, %v465
    %467 = vmatmul.f32.gmra.mxu0 %v404
    %v468 = vpop.f32.mrf.mxu0
    %v469 = vadd.f32 %v364, %v468
    %470 = vmatmul.f32.gmra.mxu0 %v407
    %v471 = vpop.f32.mrf.mxu0
    %v472 = vadd.f32 %v364, %v471
    %473 = vmatmul.f32.gmra.mxu0 %v410
    %v474 = vpop.f32.mrf.mxu0
    %v475 = vadd.f32 %v364, %v474
    %476 = vmatmul.f32.gmra.mxu0 %v413
    %v477 = vpop.f32.mrf.mxu0
    %v478 = vadd.f32 %v364, %v477
    %479 = vdwg.mxu0
    %vm480 = vcmp.gt.f32.partialorder %v433, 0.0
    %vm481 = vcmp.gt.f32.partialorder %v436, 0.0
    %vm482 = vcmp.gt.f32.partialorder %v439, 0.0
    %vm483 = vcmp.gt.f32.partialorder %v442, 0.0
    %vm484 = vcmp.gt.f32.partialorder %v445, 0.0
    %vm485 = vcmp.gt.f32.partialorder %v448, 0.0
    %vm486 = vcmp.gt.f32.partialorder %v451, 0.0
    %vm487 = vcmp.gt.f32.partialorder %v454, 0.0
    %vm488 = vcmp.gt.f32.partialorder %v457, 0.0
    %vm489 = vcmp.gt.f32.partialorder %v460, 0.0
    %vm490 = vcmp.gt.f32.partialorder %v463, 0.0
    %vm491 = vcmp.gt.f32.partialorder %v466, 0.0
    %vm492 = vcmp.gt.f32.partialorder %v469, 0.0
    %vm493 = vcmp.gt.f32.partialorder %v472, 0.0
    %vm494 = vcmp.gt.f32.partialorder %v475, 0.0
    %vm495 = vcmp.gt.f32.partialorder %v478, 0.0
    %v496 = vmul.f32 %v433, 0.1
    %v497 = vmul.f32 %v436, 0.1
    %v498 = vmul.f32 %v439, 0.1
    %v499 = vmul.f32 %v442, 0.1
    %v500 = vmul.f32 %v445, 0.1
    %v501 = vmul.f32 %v448, 0.1
    %v502 = vmul.f32 %v451, 0.1
    %v503 = vmul.f32 %v454, 0.1
    %v504 = vmul.f32 %v457, 0.1
    %v505 = vmul.f32 %v460, 0.1
    %v506 = vmul.f32 %v463, 0.1
    %v507 = vmul.f32 %v466, 0.1
    %v508 = vmul.f32 %v469, 0.1
    %v509 = vmul.f32 %v472, 0.1
    %v510 = vmul.f32 %v475, 0.1
    %v511 = vmul.f32 %v478, 0.1
    %v512 = vsel %vm480, %v433, %v496
    %v513 = vsel %vm481, %v436, %v497
    %v514 = vsel %vm482, %v439, %v498
    %v515 = vsel %vm483, %v442, %v499
    %v516 = vsel %vm484, %v445, %v500
    %v517 = vsel %vm485, %v448, %v501
    %v518 = vsel %vm486, %v451, %v502
    %v519 = vsel %vm487, %v454, %v503
    %v520 = vsel %vm488, %v457, %v504
    %v521 = vsel %vm489, %v460, %v505
    %v522 = vsel %vm490, %v463, %v506
    %v523 = vsel %vm491, %v466, %v507
    %v524 = vsel %vm492, %v469, %v508
    %v525 = vsel %vm493, %v472, %v509
    %v526 = vsel %vm494, %v475, %v510
    %v527 = vsel %vm495, %v478, %v511
    %v528 = vld [vmem:[%s7] sm:$0x1]
    %v529 = vld [vmem:[#allocation2] sm:$0x1]
    %531 = vset.pattern.permute.xlu0 0
    %532 = vperm.xlu0 %531, %v529
    %v533 = vpop.permute.xlu0 %532
    %v535 = vperm.slane %v533, 0
    %v537 = vsel %vm59, %v528, 0
    %v540 = vsel %vm59, %v512, 0
    %v543 = vsel %vm59, %v513, 0
    %v546 = vsel %vm59, %v514, 0
    %v549 = vsel %vm59, %v515, 0
    %v552 = vsel %vm59, %v516, 0
    %v555 = vsel %vm59, %v517, 0
    %v558 = vsel %vm59, %v518, 0
    %v561 = vsel %vm59, %v519, 0
    %v564 = vsel %vm59, %v520, 0
    %v567 = vsel %vm59, %v521, 0
    %v570 = vsel %vm59, %v522, 0
    %v573 = vsel %vm59, %v523, 0
    %v576 = vsel %vm59, %v524, 0
    %v579 = vsel %vm59, %v525, 0
    %v582 = vsel %vm59, %v526, 0
    %v585 = vsel %vm59, %v527, 0
    %587 = vmatpush.xpose.msra.mxu0 %v585
    %588 = vmatpush.xpose.msra.mxu0 %v582
    %589 = vmatpush.xpose.msra.mxu0 %v579
    %590 = vmatpush.xpose.msra.mxu0 %v576
    %591 = vmatpush.xpose.msra.mxu0 %v573
    %592 = vmatpush.xpose.msra.mxu0 %v570
    %593 = vmatpush.xpose.msra.mxu0 %v567
    %594 = vmatpush.xpose.msra.mxu0 %v564
    %595 = vmatpush.xpose.msra.mxu0 %v561
    %596 = vmatpush.xpose.msra.mxu0 %v558
    %597 = vmatpush.xpose.msra.mxu0 %v555
    %598 = vmatpush.xpose.msra.mxu0 %v552
    %599 = vmatpush.xpose.msra.mxu0 %v549
    %600 = vmatpush.xpose.msra.mxu0 %v546
    %601 = vmatpush.xpose.msra.mxu0 %v543
    %602 = vmatpush.xpose.msra.mxu0 %v540
    %603 = vmatmul.f32.gmra.mxu0 %v537
    %v604 = vpop.f32.mrf.mxu0
    %v605 = vadd.f32 %v535, %v604
    %606 = vdwg.mxu0
    %607 = vst [vmem:[#allocation3] sm:$0x1] %v605
    // Predicated region
    $region38: #{tpu_custom_call.1} parent=1 // pred_check
      _
    $region39: #{tpu_custom_call.1} parent=1 // pred_check_branch
      %609 = sbr.rel (0) target = $region41
    $region40: #{tpu_custom_call.1} parent=1 // pred_region
      %611 = vsyncadd [#allocation4], 0
      %s613 = sshll.u32 [#allocation3], 4
      %s614 = int_to_ptr.vmem [resolvable:$true] %s613
      %s615 = sshll.u32 %s9, 4
      %s616 = int_to_ptr.hbm [resolvable:$true] %s615
      %618 = dma.vmem_to_hbm [thread:$0]  %s614, 16, %s616, [#allocation4]
    $region41: #{tpu_custom_call.1} parent=1 // pred_fallthru
      _
    // Predicated region
    $region42: #{tpu_custom_call.1} parent=1 // pred_check
      _
    $region43: #{tpu_custom_call.1} parent=1 // pred_check_branch
      %620 = sbr.rel (0) target = $region45
    $region44: #{tpu_custom_call.1} parent=1 // pred_region
      %622 = dma.done [#allocation4], 16
    $region45: #{tpu_custom_call.1} parent=1 // pred_fallthru
      _
    %623 = vsyncpa [#allocation4], 1

</llo_original>
